<compile_context>
chip_gen: v7x
topology: tpu7x:2x2x1
jax: 0.10.0
libtpu: 0.0.40
codegen_flags: <defaults>
</compile_context>

<pallas_src>
import functools

import jax
import jax.numpy as jnp
from jax import lax
from jax.experimental import pallas as pl
from jax.experimental.pallas import tpu as pltpu


def _up_fire_de_kernel(x_ref, wsq_ref, bsq_ref, wde_ref, bde_ref,
                       wexp_ref, bexp_ref, out_ref, *, H, W):
    HW = H * W

    # ---- fused squeeze -> ReLU -> deconv(k=1), all channel-major (C, HW) ----------
    x = x_ref[0]                                                         # (Cin, HW)
    s = jnp.dot(wsq_ref[...], x, preferred_element_type=jnp.float32) + bsq_ref[...]
    s = jnp.maximum(s, 0.0)                                              # squeeze+ReLU
    # ConvTranspose2d(k=1, stride=1, pad=0) == 1x1 conv with the weight read (out, in).
    y = jnp.dot(wde_ref[...], s, preferred_element_type=jnp.float32) + bde_ref[...]
    Csq = y.shape[0]                                                     # (Csq, HW)

    # ---- channel-major im2col for the 3x3 window, built in registers --------------
    # Tap (dy, dx): lane roll by -(dy*W + dx) (XLU slot) + static border mask (VPU).
    lane = lax.broadcasted_iota(jnp.int32, (Csq, HW), 1)
    # Column index without integer div: bitwise path when W is a power of two.
    col = (lane & (W - 1)) if (W & (W - 1)) == 0 else (lane % W)
    taps = []
    for dy in (-1, 0, 1):
        for dx in (-1, 0, 1):
            off = dy * W + dx
            t = y if off == 0 else pltpu.roll(y, shift=(-off) % HW, axis=1)
            ok = None
            if dx == -1:
                ok = col >= 1                       # no left neighbour in column 0
            elif dx == 1:
                ok = col < W - 1                    # no right neighbour in last column
            if dy == -1:
                m = lane >= W                       # no upper neighbour in row 0
                ok = m if ok is None else (ok & m)
            elif dy == 1:
                m = lane < HW - W                   # no lower neighbour in last row
                ok = m if ok is None else (ok & m)
            taps.append(t if ok is None else jnp.where(ok, t, 0.0))
    im2col = jnp.concatenate(taps, axis=0)                               # (9*Csq, HW)

    # ---- both expand branches in one K = 9*Csq MXU call, ReLU, full-lane store ----
    e = jnp.dot(wexp_ref[...], im2col, preferred_element_type=jnp.float32) + bexp_ref[...]
    out_ref[0] = jnp.maximum(e, 0.0)                                     # (C1+C3, HW)


def up_fire_de(x_nchw, params):
    N, Cin, H, W = x_nchw.shape
    wsq, bsq = params["wsq"], params["bsq"]      # (Csq, Cin), (Csq,)
    wde, bde = params["wde"], params["bde"]      # (Csq, Csq) stored (out, in), (Csq,)
    w1, b1 = params["w1"], params["b1"]          # (C1, Csq), (C1,)
    w3, b3 = params["w3"], params["b3"]          # (9, C3, Csq) per-tap (out, in), (C3,)
    Csq = wsq.shape[0]
    C1 = w1.shape[0]
    C3 = w3.shape[1]
    Ctot = C1 + C3
    HW = H * W

    # NCHW is already channel-major: (N, Cin, H*W) is a free reshape (no XLA transpose).
    x_cm = x_nchw.reshape(N, Cin, HW).astype(jnp.float32)

    # Prepack expand1x1 + expand3x3 into one (Ctot, 9*Csq) weight acting on the
    # tap-major im2col; w1 occupies the centre-tap (dy=dx=0 -> tap 4) column block.
    w3_flat = jnp.transpose(w3, (1, 0, 2)).reshape(C3, 9 * Csq)
    w_exp = jnp.zeros((Ctot, 9 * Csq), jnp.float32)
    w_exp = w_exp.at[:C1, 4 * Csq:5 * Csq].set(w1.astype(jnp.float32))
    w_exp = w_exp.at[C1:, :].set(w3_flat.astype(jnp.float32))
    b_exp = jnp.concatenate([b1, b3]).reshape(Ctot, 1).astype(jnp.float32)

    kernel = functools.partial(_up_fire_de_kernel, H=H, W=W)

    # grid=(N,) "parallel": N=2 here keeps both v7x TensorCores busy.  For N == 1 add
    # a second parallel axis over HW; for large N on v5e, batch-block the BlockSpecs.
    out = pl.pallas_call(
        kernel,
        out_shape=jax.ShapeDtypeStruct((N, Ctot, HW), jnp.float32),
        grid=(N,),
        in_specs=[
            pl.BlockSpec((1, Cin, HW), lambda n: (n, 0, 0)),
            pl.BlockSpec((Csq, Cin), lambda n: (0, 0)),
            pl.BlockSpec((Csq, 1), lambda n: (0, 0)),
            pl.BlockSpec((Csq, Csq), lambda n: (0, 0)),
            pl.BlockSpec((Csq, 1), lambda n: (0, 0)),
            pl.BlockSpec((Ctot, 9 * Csq), lambda n: (0, 0)),
            pl.BlockSpec((Ctot, 1), lambda n: (0, 0)),
        ],
        out_specs=pl.BlockSpec((1, Ctot, HW), lambda n: (n, 0, 0)),
        compiler_params=pltpu.CompilerParams(
            dimension_semantics=("parallel",),
        ),
    )(x_cm, wsq.astype(jnp.float32), bsq.reshape(Csq, 1).astype(jnp.float32),
      wde.astype(jnp.float32), bde.reshape(Csq, 1).astype(jnp.float32), w_exp, b_exp)

    # (N, C1+C3, H*W) is already NCHW up to a free reshape — no transpose, no concat.
    return out.reshape(N, Ctot, H, W)


# ---------------------------------------------------------------------------------
# Deterministic synthetic parameters in kernel-friendly (out, in) layouts.
# Mapping from the PyTorch module:
#   squeeze.weight   (Csq, Cin, 1, 1) -> wsq = weight[:, :, 0, 0]             (out, in)
#   deconv.weight    (Csq, Csq, 1, 1) -> wde = weight[:, :, 0, 0].T           (out, in)
#   expand1x1.weight (C1,  Csq, 1, 1) -> w1  = weight[:, :, 0, 0]             (out, in)
#   expand3x3.weight (C3,  Csq, 3, 3) -> w3[dy*3+dx] = weight[:, :, dy, dx]   (out, in)
# ---------------------------------------------------------------------------------
def init_params(key, inplanes, squeeze_planes, expand1x1_planes, expand3x3_planes):
    ks = jax.random.split(key, 8)
    scale = 0.1
    return dict(
        wsq=scale * jax.random.normal(ks[0], (squeeze_planes, inplanes), jnp.float32),
        bsq=scale * jax.random.normal(ks[1], (squeeze_planes,), jnp.float32),
        wde=scale * jax.random.normal(ks[2], (squeeze_planes, squeeze_planes), jnp.float32),
        bde=scale * jax.random.normal(ks[3], (squeeze_planes,), jnp.float32),
        w1=scale * jax.random.normal(ks[4], (expand1x1_planes, squeeze_planes), jnp.float32),
        b1=scale * jax.random.normal(ks[5], (expand1x1_planes,), jnp.float32),
        w3=scale * jax.random.normal(ks[6], (9, expand3x3_planes, squeeze_planes), jnp.float32),
        b3=scale * jax.random.normal(ks[7], (expand3x3_planes,), jnp.float32),
    )


# Pure-JAX reference (XLA convolutions, NCHW throughout) for correctness checking.
def up_fire_de_ref(x_nchw, params):
    wsq, bsq = params["wsq"], params["bsq"]
    wde, bde = params["wde"], params["bde"]
    w1, b1 = params["w1"], params["b1"]
    w3, b3 = params["w3"], params["b3"]
    Csq, Cin = wsq.shape
    C1 = w1.shape[0]
    C3 = w3.shape[1]
    dn = ("NCHW", "OIHW", "NCHW")
    x = x_nchw.astype(jnp.float32)

    def conv(v, w, padding):
        return lax.conv_general_dilated(v, w, (1, 1), padding, dimension_numbers=dn)

    s = jnp.maximum(conv(x, wsq.reshape(Csq, Cin, 1, 1), "VALID")
                    + bsq[None, :, None, None], 0.0)
    y = conv(s, wde.reshape(Csq, Csq, 1, 1), "VALID") + bde[None, :, None, None]
    e1 = jnp.maximum(conv(y, w1.reshape(C1, Csq, 1, 1), "VALID")
                     + b1[None, :, None, None], 0.0)
    w3_oihw = jnp.transpose(w3.reshape(3, 3, C3, Csq), (2, 3, 0, 1))
    e3 = jnp.maximum(conv(y, w3_oihw, "SAME") + b3[None, :, None, None], 0.0)
    return jnp.concatenate([e1, e3], axis=1)


if __name__ == "__main__":
    # Small shapes consistent with the module: x is NCHW (2, 4, 16, 16).
    N, Cin, H, W = 2, 4, 16, 16
    squeeze_planes, expand1x1_planes, expand3x3_planes = 8, 16, 16

    key = jax.random.PRNGKey(0)
    kx, kp = jax.random.split(key)
    x = jax.random.normal(kx, (N, Cin, H, W), jnp.float32)
    params = init_params(kp, Cin, squeeze_planes, expand1x1_planes, expand3x3_planes)

    out = jax.block_until_ready(up_fire_de(x, params))

    expected_shape = (N, expand1x1_planes + expand3x3_planes, H, W)
    assert out.shape == expected_shape, (out.shape, expected_shape)

    ref = jax.block_until_ready(up_fire_de_ref(x, params))
    assert jnp.allclose(out, ref, atol=1e-4, rtol=1e-4), float(jnp.max(jnp.abs(out - ref)))

    print("KERNEL_OK")
</pallas_src>

<mosaic_0001>
module attributes {stable_mosaic.version = 11 : i64} {
  func.func @_up_fire_de_kernel(%arg0: i32, %arg1: memref<1x4x256xf32, #tpu.memory_space<vmem>>, %arg2: memref<8x4xf32, #tpu.memory_space<vmem>>, %arg3: memref<8x1xf32, #tpu.memory_space<vmem>>, %arg4: memref<8x8xf32, #tpu.memory_space<vmem>>, %arg5: memref<8x1xf32, #tpu.memory_space<vmem>>, %arg6: memref<32x72xf32, #tpu.memory_space<vmem>>, %arg7: memref<32x1xf32, #tpu.memory_space<vmem>>, %arg8: memref<1x32x256xf32, #tpu.memory_space<vmem>>) attributes {dimension_semantics = [#tpu.dimension_semantics<parallel>], iteration_bounds = array<i64: 2>, scalar_prefetch = 0 : i64, scratch_operands = 0 : i64, tpu.core_type = #tpu.core_type<tc>, window_params = [{transform_indices = @transform_0, window_bounds = array<i64: 1, 4, 256>}, {pipeline_mode = #tpu.pipeline_mode<synchronous>, transform_indices = @transform_1, window_bounds = array<i64: 8, 4>}, {pipeline_mode = #tpu.pipeline_mode<synchronous>, transform_indices = @transform_2, window_bounds = array<i64: 8, 1>}, {pipeline_mode = #tpu.pipeline_mode<synchronous>, transform_indices = @transform_3, window_bounds = array<i64: 8, 8>}, {pipeline_mode = #tpu.pipeline_mode<synchronous>, transform_indices = @transform_4, window_bounds = array<i64: 8, 1>}, {pipeline_mode = #tpu.pipeline_mode<synchronous>, transform_indices = @transform_5, window_bounds = array<i64: 32, 72>}, {pipeline_mode = #tpu.pipeline_mode<synchronous>, transform_indices = @transform_6, window_bounds = array<i64: 32, 1>}, {transform_indices = @transform_7, window_bounds = array<i64: 1, 32, 256>}]} {
    %c0 = arith.constant 0 : index
    %c0_0 = arith.constant 0 : index
    %c0_1 = arith.constant 0 : index
    %0 = vector.load %arg1[%c0, %c0_0, %c0_1] : memref<1x4x256xf32, #tpu.memory_space<vmem>>, vector<1x4x256xf32>
    %1 = vector.shape_cast %0 : vector<1x4x256xf32> to vector<4x256xf32>
    %c0_2 = arith.constant 0 : index
    %c0_3 = arith.constant 0 : index
    %2 = vector.load %arg2[%c0_2, %c0_3] : memref<8x4xf32, #tpu.memory_space<vmem>>, vector<8x4xf32>
    %cst = arith.constant dense<0.000000e+00> : vector<8x256xf32>
    %3 = tpu.matmul %2, %1, %cst {dimension_numbers = #tpu.dot_dimension_numbers<[1], [0], [0], [1], [0, 0, 1, 1], [], []>} : vector<8x4xf32>, vector<4x256xf32>, vector<8x256xf32> -> vector<8x256xf32>
    %c0_4 = arith.constant 0 : index
    %c0_5 = arith.constant 0 : index
    %4 = vector.load %arg3[%c0_4, %c0_5] : memref<8x1xf32, #tpu.memory_space<vmem>>, vector<8x1xf32>
    %5 = vector.broadcast %4 : vector<8x1xf32> to vector<8x256xf32>
    %6 = arith.addf %3, %5 : vector<8x256xf32>
    %cst_6 = arith.constant 0.000000e+00 : f32
    %7 = vector.broadcast %cst_6 : f32 to vector<8x256xf32>
    %8 = arith.maximumf %6, %7 : vector<8x256xf32>
    %c0_7 = arith.constant 0 : index
    %c0_8 = arith.constant 0 : index
    %9 = vector.load %arg4[%c0_7, %c0_8] : memref<8x8xf32, #tpu.memory_space<vmem>>, vector<8x8xf32>
    %cst_9 = arith.constant dense<0.000000e+00> : vector<8x256xf32>
    %10 = tpu.matmul %9, %8, %cst_9 {dimension_numbers = #tpu.dot_dimension_numbers<[1], [0], [0], [1], [0, 0, 1, 1], [], []>} : vector<8x8xf32>, vector<8x256xf32>, vector<8x256xf32> -> vector<8x256xf32>
    %c0_10 = arith.constant 0 : index
    %c0_11 = arith.constant 0 : index
    %11 = vector.load %arg5[%c0_10, %c0_11] : memref<8x1xf32, #tpu.memory_space<vmem>>, vector<8x1xf32>
    %12 = vector.broadcast %11 : vector<8x1xf32> to vector<8x256xf32>
    %13 = arith.addf %10, %12 : vector<8x256xf32>
    %14 = tpu.iota {dimensions = array<i32: 1>} : vector<8x256xi32>
    %c15_i32 = arith.constant 15 : i32
    %15 = vector.broadcast %c15_i32 : i32 to vector<8x256xi32>
    %16 = arith.andi %14, %15 : vector<8x256xi32>
    %c17_i32 = arith.constant 17 : i32
    %17 = tpu.dynamic_rotate %13 by %c17_i32 dim 1 : vector<8x256xf32>, i32 -> vector<8x256xf32>
    %c1_i32 = arith.constant 1 : i32
    %18 = vector.broadcast %c1_i32 : i32 to vector<8x256xi32>
    %19 = arith.cmpi sge, %16, %18 : vector<8x256xi32>
    %c16_i32 = arith.constant 16 : i32
    %20 = vector.broadcast %c16_i32 : i32 to vector<8x256xi32>
    %21 = arith.cmpi sge, %14, %20 : vector<8x256xi32>
    %22 = arith.andi %19, %21 : vector<8x256xi1>
    %cst_12 = arith.constant 0.000000e+00 : f32
    %23 = vector.broadcast %cst_12 : f32 to vector<8x256xf32>
    %24 = arith.select %22, %17, %23 : vector<8x256xi1>, vector<8x256xf32>
    %c16_i32_13 = arith.constant 16 : i32
    %25 = tpu.dynamic_rotate %13 by %c16_i32_13 dim 1 : vector<8x256xf32>, i32 -> vector<8x256xf32>
    %c16_i32_14 = arith.constant 16 : i32
    %26 = vector.broadcast %c16_i32_14 : i32 to vector<8x256xi32>
    %27 = arith.cmpi sge, %14, %26 : vector<8x256xi32>
    %cst_15 = arith.constant 0.000000e+00 : f32
    %28 = vector.broadcast %cst_15 : f32 to vector<8x256xf32>
    %29 = arith.select %27, %25, %28 : vector<8x256xi1>, vector<8x256xf32>
    %c15_i32_16 = arith.constant 15 : i32
    %30 = tpu.dynamic_rotate %13 by %c15_i32_16 dim 1 : vector<8x256xf32>, i32 -> vector<8x256xf32>
    %c15_i32_17 = arith.constant 15 : i32
    %31 = vector.broadcast %c15_i32_17 : i32 to vector<8x256xi32>
    %32 = arith.cmpi slt, %16, %31 : vector<8x256xi32>
    %c16_i32_18 = arith.constant 16 : i32
    %33 = vector.broadcast %c16_i32_18 : i32 to vector<8x256xi32>
    %34 = arith.cmpi sge, %14, %33 : vector<8x256xi32>
    %35 = arith.andi %32, %34 : vector<8x256xi1>
    %cst_19 = arith.constant 0.000000e+00 : f32
    %36 = vector.broadcast %cst_19 : f32 to vector<8x256xf32>
    %37 = arith.select %35, %30, %36 : vector<8x256xi1>, vector<8x256xf32>
    %c1_i32_20 = arith.constant 1 : i32
    %38 = tpu.dynamic_rotate %13 by %c1_i32_20 dim 1 : vector<8x256xf32>, i32 -> vector<8x256xf32>
    %c1_i32_21 = arith.constant 1 : i32
    %39 = vector.broadcast %c1_i32_21 : i32 to vector<8x256xi32>
    %40 = arith.cmpi sge, %16, %39 : vector<8x256xi32>
    %cst_22 = arith.constant 0.000000e+00 : f32
    %41 = vector.broadcast %cst_22 : f32 to vector<8x256xf32>
    %42 = arith.select %40, %38, %41 : vector<8x256xi1>, vector<8x256xf32>
    %c255_i32 = arith.constant 255 : i32
    %43 = tpu.dynamic_rotate %13 by %c255_i32 dim 1 : vector<8x256xf32>, i32 -> vector<8x256xf32>
    %c15_i32_23 = arith.constant 15 : i32
    %44 = vector.broadcast %c15_i32_23 : i32 to vector<8x256xi32>
    %45 = arith.cmpi slt, %16, %44 : vector<8x256xi32>
    %cst_24 = arith.constant 0.000000e+00 : f32
    %46 = vector.broadcast %cst_24 : f32 to vector<8x256xf32>
    %47 = arith.select %45, %43, %46 : vector<8x256xi1>, vector<8x256xf32>
    %c241_i32 = arith.constant 241 : i32
    %48 = tpu.dynamic_rotate %13 by %c241_i32 dim 1 : vector<8x256xf32>, i32 -> vector<8x256xf32>
    %c1_i32_25 = arith.constant 1 : i32
    %49 = vector.broadcast %c1_i32_25 : i32 to vector<8x256xi32>
    %50 = arith.cmpi sge, %16, %49 : vector<8x256xi32>
    %c240_i32 = arith.constant 240 : i32
    %51 = vector.broadcast %c240_i32 : i32 to vector<8x256xi32>
    %52 = arith.cmpi slt, %14, %51 : vector<8x256xi32>
    %53 = arith.andi %50, %52 : vector<8x256xi1>
    %cst_26 = arith.constant 0.000000e+00 : f32
    %54 = vector.broadcast %cst_26 : f32 to vector<8x256xf32>
    %55 = arith.select %53, %48, %54 : vector<8x256xi1>, vector<8x256xf32>
    %c240_i32_27 = arith.constant 240 : i32
    %56 = tpu.dynamic_rotate %13 by %c240_i32_27 dim 1 : vector<8x256xf32>, i32 -> vector<8x256xf32>
    %c240_i32_28 = arith.constant 240 : i32
    %57 = vector.broadcast %c240_i32_28 : i32 to vector<8x256xi32>
    %58 = arith.cmpi slt, %14, %57 : vector<8x256xi32>
    %cst_29 = arith.constant 0.000000e+00 : f32
    %59 = vector.broadcast %cst_29 : f32 to vector<8x256xf32>
    %60 = arith.select %58, %56, %59 : vector<8x256xi1>, vector<8x256xf32>
    %c239_i32 = arith.constant 239 : i32
    %61 = tpu.dynamic_rotate %13 by %c239_i32 dim 1 : vector<8x256xf32>, i32 -> vector<8x256xf32>
    %c15_i32_30 = arith.constant 15 : i32
    %62 = vector.broadcast %c15_i32_30 : i32 to vector<8x256xi32>
    %63 = arith.cmpi slt, %16, %62 : vector<8x256xi32>
    %c240_i32_31 = arith.constant 240 : i32
    %64 = vector.broadcast %c240_i32_31 : i32 to vector<8x256xi32>
    %65 = arith.cmpi slt, %14, %64 : vector<8x256xi32>
    %66 = arith.andi %63, %65 : vector<8x256xi1>
    %cst_32 = arith.constant 0.000000e+00 : f32
    %67 = vector.broadcast %cst_32 : f32 to vector<8x256xf32>
    %68 = arith.select %66, %61, %67 : vector<8x256xi1>, vector<8x256xf32>
    %69 = tpu.concatenate %24, %29, %37, %42, %13, %47, %55, %60, %68 in 0 : vector<8x256xf32>, vector<8x256xf32>, vector<8x256xf32>, vector<8x256xf32>, vector<8x256xf32>, vector<8x256xf32>, vector<8x256xf32>, vector<8x256xf32>, vector<8x256xf32> -> vector<72x256xf32>
    %c0_33 = arith.constant 0 : index
    %c0_34 = arith.constant 0 : index
    %70 = vector.load %arg6[%c0_33, %c0_34] : memref<32x72xf32, #tpu.memory_space<vmem>>, vector<32x72xf32>
    %cst_35 = arith.constant dense<0.000000e+00> : vector<32x256xf32>
    %71 = tpu.matmul %70, %69, %cst_35 {dimension_numbers = #tpu.dot_dimension_numbers<[1], [0], [0], [1], [0, 0, 1, 1], [], []>} : vector<32x72xf32>, vector<72x256xf32>, vector<32x256xf32> -> vector<32x256xf32>
    %c0_36 = arith.constant 0 : index
    %c0_37 = arith.constant 0 : index
    %72 = vector.load %arg7[%c0_36, %c0_37] : memref<32x1xf32, #tpu.memory_space<vmem>>, vector<32x1xf32>
    %73 = vector.broadcast %72 : vector<32x1xf32> to vector<32x256xf32>
    %74 = arith.addf %71, %73 : vector<32x256xf32>
    %cst_38 = arith.constant 0.000000e+00 : f32
    %75 = vector.broadcast %cst_38 : f32 to vector<32x256xf32>
    %76 = arith.maximumf %74, %75 : vector<32x256xf32>
    %c0_39 = arith.constant 0 : index
    %c0_40 = arith.constant 0 : index
    %c0_41 = arith.constant 0 : index
    %77 = vector.load %arg8[%c0_39, %c0_40, %c0_41] : memref<1x32x256xf32, #tpu.memory_space<vmem>>, vector<1x32x256xf32>
    %78 = vector.shape_cast %77 : vector<1x32x256xf32> to vector<32x256xf32>
    %79 = vector.shape_cast %76 : vector<32x256xf32> to vector<1x32x256xf32>
    tpu.vector_store %arg8[%c0_39, %c0_40, %c0_41], %79 {strides = array<i32>} : memref<1x32x256xf32, #tpu.memory_space<vmem>>, vector<1x32x256xf32>,
    return
  }
  func.func @transform_0(%arg0: i32) -> (i32, i32, i32) {
    %c0_i32 = arith.constant 0 : i32
    %c0_i32_0 = arith.constant 0 : i32
    %c0_i32_1 = arith.constant 0 : i32
    return %arg0, %c0_i32, %c0_i32_0 : i32, i32, i32
  }
  func.func @transform_1(%arg0: i32) -> (i32, i32) {
    %c0_i32 = arith.constant 0 : i32
    %c0_i32_0 = arith.constant 0 : i32
    %c0_i32_1 = arith.constant 0 : i32
    return %c0_i32, %c0_i32_0 : i32, i32
  }
  func.func @transform_2(%arg0: i32) -> (i32, i32) {
    %c0_i32 = arith.constant 0 : i32
    %c0_i32_0 = arith.constant 0 : i32
    %c0_i32_1 = arith.constant 0 : i32
    return %c0_i32, %c0_i32_0 : i32, i32
  }
  func.func @transform_3(%arg0: i32) -> (i32, i32) {
    %c0_i32 = arith.constant 0 : i32
    %c0_i32_0 = arith.constant 0 : i32
    %c0_i32_1 = arith.constant 0 : i32
    return %c0_i32, %c0_i32_0 : i32, i32
  }
  func.func @transform_4(%arg0: i32) -> (i32, i32) {
    %c0_i32 = arith.constant 0 : i32
    %c0_i32_0 = arith.constant 0 : i32
    %c0_i32_1 = arith.constant 0 : i32
    return %c0_i32, %c0_i32_0 : i32, i32
  }
  func.func @transform_5(%arg0: i32) -> (i32, i32) {
    %c0_i32 = arith.constant 0 : i32
    %c0_i32_0 = arith.constant 0 : i32
    %c0_i32_1 = arith.constant 0 : i32
    return %c0_i32, %c0_i32_0 : i32, i32
  }
  func.func @transform_6(%arg0: i32) -> (i32, i32) {
    %c0_i32 = arith.constant 0 : i32
    %c0_i32_0 = arith.constant 0 : i32
    %c0_i32_1 = arith.constant 0 : i32
    return %c0_i32, %c0_i32_0 : i32, i32
  }
  func.func @transform_7(%arg0: i32) -> (i32, i32, i32) {
    %c0_i32 = arith.constant 0 : i32
    %c0_i32_0 = arith.constant 0 : i32
    %c0_i32_1 = arith.constant 0 : i32
    return %arg0, %c0_i32, %c0_i32_0 : i32, i32, i32
  }
}

</mosaic_0001>

<llo_original>
// kernel: tpu_custom_call.1
$region0: #{tpu_custom_call.1}
  #allocation0 [shape = 'u32[]', space=smem, size = 0x4, offset = 0x4, fixed_abs, tag = 'smem constant byte address 0x4 - core index']
  #allocation1 [shape = 'u32[144,128]{1,0:T(1,128)}', space=vmem, size = 0x12000, scoped, tag = 'internal scratch']
  %s0 = inlined_call_operand.vmem [shape: f32[2,4,256], index: 0, kind: input, shape index: {}]
  %s1 = inlined_call_operand.vmem [shape: f32[8,4], index: 1, kind: input, shape index: {}]
  %s2 = inlined_call_operand.vmem [shape: f32[8,1], index: 2, kind: input, shape index: {}]
  %s3 = inlined_call_operand.vmem [shape: f32[8,8], index: 3, kind: input, shape index: {}]
  %s4 = inlined_call_operand.vmem [shape: f32[8,1], index: 4, kind: input, shape index: {}]
  %s5 = inlined_call_operand.vmem [shape: f32[32,72], index: 5, kind: input, shape index: {}]
  %s6 = inlined_call_operand.vmem [shape: f32[32,1], index: 6, kind: input, shape index: {}]
  %s7 = inlined_call_operand.hbm [shape: f32[2,32,256], index: 7, kind: output, shape index: {}]
  %s8 = sld [smem:[#allocation0]]
  $region61: #{tpu_custom_call.1} parent=0
    _
  %s10 = ssub.s32 1, %s8
  %s11 = scalar_select 0, %s10, %s8
  $region1: #{tpu_custom_call.1} parent=0
    #allocation2 [shape = 'u8[65536]{0}', space=vmem, size = 0x10000, scoped, tag = 'output window, operand 0']
    #allocation3 [shape = 's32[2]{0}', space=sflag, size = 0x8, scoped, tag = 'scoped memory for tpu_custom_call.1']
    %12 = vsyncpa [#allocation3], 0
    %s13 = scalar_lea.sflag [#allocation3], 1
    %14 = vsyncpa %s13, 0
    loop: start=0, step=1, limit=4
    $region2: #{tpu_custom_call.1} parent=1 // loop_pre_header
      _
    $region3: #{tpu_custom_call.1} parent=1 // loop_header
      %s16 = sphi 0, %s20
      %p17 = scmp.ge.s32.totalorder %s16, 4
      %s26 = sphi 0, %s28
      %s29 = sphi 0, %s26
      %s30 = sphi 0, %s29
      %s46 = sphi 0, %s30
      %s50 = sphi 0, %s50
      %s52 = sphi 0, %s50
      %s53 = sphi 0, %s52
      %s67 = sphi 0, %s53
      %s71 = sphi 0, %s71
      %s73 = sphi 0, %s71
      %s74 = sphi 0, %s73
      %s88 = sphi 0, %s74
      %s92 = sphi 0, %s92
      %s94 = sphi 0, %s92
      %s95 = sphi 0, %s94
      %s109 = sphi 0, %s95
      %s113 = sphi 0, %s113
      %s115 = sphi 0, %s113
      %s116 = sphi 0, %s115
      %s130 = sphi 0, %s116
      %s134 = sphi 0, %s134
      %s136 = sphi 0, %s134
      %s137 = sphi 0, %s136
      %s151 = sphi 0, %s137
      %s155 = sphi 0, %s155
      %s157 = sphi 0, %s155
      %s158 = sphi 0, %s157
      %s172 = sphi 0, %s158
      %s178 = sphi 0, %s180
      %s181 = sphi 0, %s178
      %s182 = sphi 0, %s181
      %s198 = sphi 0, %s182
    $region4: #{tpu_custom_call.1} parent=1 // loop_header_branch
      %19 = sbr.rel (%p17) target = $region8
    $region5: #{tpu_custom_call.1} parent=1 // loop_body
      %s21 = ssub.s32 %s16, 1
      %s22 = ssub.s32 %s16, 2
      %s23 = sadd.s32 %s16, 1
      %s24 = ssub.s32 %s16, %s23
      %p25 = scmp.eq.s32.totalorder %s24, 0
      %s27 = sadd.s32 %s26, 1
      %s28 = scalar_select %p25, %s26, %s27
      %p31 = pneg %p25
      %p32 = scmp.eq.s32.totalorder %s16, 1
      %p33 = por %p31, %p32
      %p34 = scmp.ne.s32.totalorder %s26, %s29
      %p35 = scmp.eq.s32.totalorder %s16, 0
      %p36 = por %p34, %p35
      %p37 = scmp.ne.s32.totalorder %s26, %s29
      %p38 = scmp.eq.s32.totalorder %s21, 1
      %p39 = por %p37, %p38
      %p40 = scmp.ne.s32.totalorder %s29, %s30
      %p41 = scmp.eq.s32.totalorder %s21, 0
      %p42 = por %p40, %p41
      %p43 = scmp.ne.s32.totalorder %s29, %s30
      %p44 = scmp.eq.s32.totalorder %s22, 1
      %p45 = por %p43, %p44
      %p47 = scmp.ne.s32.totalorder %s30, %s46
      %p48 = scmp.eq.s32.totalorder %s22, 0
      %p49 = por %p47, %p48
      %s51 = sadd.s32 %s50, 1
      %p54 = scmp.eq.s32.totalorder %s16, 1
      %p55 = scmp.ne.s32.totalorder %s50, %s52
      %p56 = scmp.eq.s32.totalorder %s16, 0
      %p57 = por %p55, %p56
      %p58 = scmp.ne.s32.totalorder %s50, %s52
      %p59 = scmp.eq.s32.totalorder %s21, 1
      %p60 = por %p58, %p59
      %p61 = scmp.ne.s32.totalorder %s52, %s53
      %p62 = scmp.eq.s32.totalorder %s21, 0
      %p63 = por %p61, %p62
      %p64 = scmp.ne.s32.totalorder %s52, %s53
      %p65 = scmp.eq.s32.totalorder %s22, 1
      %p66 = por %p64, %p65
      %p68 = scmp.ne.s32.totalorder %s53, %s67
      %p69 = scmp.eq.s32.totalorder %s22, 0
      %p70 = por %p68, %p69
      %s72 = sadd.s32 %s71, 1
      %p75 = scmp.eq.s32.totalorder %s16, 1
      %p76 = scmp.ne.s32.totalorder %s71, %s73
      %p77 = scmp.eq.s32.totalorder %s16, 0
      %p78 = por %p76, %p77
      %p79 = scmp.ne.s32.totalorder %s71, %s73
      %p80 = scmp.eq.s32.totalorder %s21, 1
      %p81 = por %p79, %p80
      %p82 = scmp.ne.s32.totalorder %s73, %s74
      %p83 = scmp.eq.s32.totalorder %s21, 0
      %p84 = por %p82, %p83
      %p85 = scmp.ne.s32.totalorder %s73, %s74
      %p86 = scmp.eq.s32.totalorder %s22, 1
      %p87 = por %p85, %p86
      %p89 = scmp.ne.s32.totalorder %s74, %s88
      %p90 = scmp.eq.s32.totalorder %s22, 0
      %p91 = por %p89, %p90
      %s93 = sadd.s32 %s92, 1
      %p96 = scmp.eq.s32.totalorder %s16, 1
      %p97 = scmp.ne.s32.totalorder %s92, %s94
      %p98 = scmp.eq.s32.totalorder %s16, 0
      %p99 = por %p97, %p98
      %p100 = scmp.ne.s32.totalorder %s92, %s94
      %p101 = scmp.eq.s32.totalorder %s21, 1
      %p102 = por %p100, %p101
      %p103 = scmp.ne.s32.totalorder %s94, %s95
      %p104 = scmp.eq.s32.totalorder %s21, 0
      %p105 = por %p103, %p104
      %p106 = scmp.ne.s32.totalorder %s94, %s95
      %p107 = scmp.eq.s32.totalorder %s22, 1
      %p108 = por %p106, %p107
      %p110 = scmp.ne.s32.totalorder %s95, %s109
      %p111 = scmp.eq.s32.totalorder %s22, 0
      %p112 = por %p110, %p111
      %s114 = sadd.s32 %s113, 1
      %p117 = scmp.eq.s32.totalorder %s16, 1
      %p118 = scmp.ne.s32.totalorder %s113, %s115
      %p119 = scmp.eq.s32.totalorder %s16, 0
      %p120 = por %p118, %p119
      %p121 = scmp.ne.s32.totalorder %s113, %s115
      %p122 = scmp.eq.s32.totalorder %s21, 1
      %p123 = por %p121, %p122
      %p124 = scmp.ne.s32.totalorder %s115, %s116
      %p125 = scmp.eq.s32.totalorder %s21, 0
      %p126 = por %p124, %p125
      %p127 = scmp.ne.s32.totalorder %s115, %s116
      %p128 = scmp.eq.s32.totalorder %s22, 1
      %p129 = por %p127, %p128
      %p131 = scmp.ne.s32.totalorder %s116, %s130
      %p132 = scmp.eq.s32.totalorder %s22, 0
      %p133 = por %p131, %p132
      %s135 = sadd.s32 %s134, 1
      %p138 = scmp.eq.s32.totalorder %s16, 1
      %p139 = scmp.ne.s32.totalorder %s134, %s136
      %p140 = scmp.eq.s32.totalorder %s16, 0
      %p141 = por %p139, %p140
      %p142 = scmp.ne.s32.totalorder %s134, %s136
      %p143 = scmp.eq.s32.totalorder %s21, 1
      %p144 = por %p142, %p143
      %p145 = scmp.ne.s32.totalorder %s136, %s137
      %p146 = scmp.eq.s32.totalorder %s21, 0
      %p147 = por %p145, %p146
      %p148 = scmp.ne.s32.totalorder %s136, %s137
      %p149 = scmp.eq.s32.totalorder %s22, 1
      %p150 = por %p148, %p149
      %p152 = scmp.ne.s32.totalorder %s137, %s151
      %p153 = scmp.eq.s32.totalorder %s22, 0
      %p154 = por %p152, %p153
      %s156 = sadd.s32 %s155, 1
      %p159 = scmp.eq.s32.totalorder %s16, 1
      %p160 = scmp.ne.s32.totalorder %s155, %s157
      %p161 = scmp.eq.s32.totalorder %s16, 0
      %p162 = por %p160, %p161
      %p163 = scmp.ne.s32.totalorder %s155, %s157
      %p164 = scmp.eq.s32.totalorder %s21, 1
      %p165 = por %p163, %p164
      %p166 = scmp.ne.s32.totalorder %s157, %s158
      %p167 = scmp.eq.s32.totalorder %s21, 0
      %p168 = por %p166, %p167
      %p169 = scmp.ne.s32.totalorder %s157, %s158
      %p170 = scmp.eq.s32.totalorder %s22, 1
      %p171 = por %p169, %p170
      %p173 = scmp.ne.s32.totalorder %s158, %s172
      %p174 = scmp.eq.s32.totalorder %s22, 0
      %p175 = por %p173, %p174
      %s176 = ssub.s32 %s16, %s23
      %p177 = scmp.eq.s32.totalorder %s176, 0
      %s179 = sadd.s32 %s178, 1
      %s180 = scalar_select %p177, %s178, %s179
      %p183 = pneg %p177
      %p184 = scmp.eq.s32.totalorder %s16, 1
      %p185 = por %p183, %p184
      %p186 = scmp.ne.s32.totalorder %s178, %s181
      %p187 = scmp.eq.s32.totalorder %s16, 0
      %p188 = por %p186, %p187
      %p189 = scmp.ne.s32.totalorder %s178, %s181
      %p190 = scmp.eq.s32.totalorder %s21, 1
      %p191 = por %p189, %p190
      %p192 = scmp.ne.s32.totalorder %s181, %s182
      %p193 = scmp.eq.s32.totalorder %s21, 0
      %p194 = por %p192, %p193
      %p195 = scmp.ne.s32.totalorder %s181, %s182
      %p196 = scmp.eq.s32.totalorder %s22, 1
      %p197 = por %p195, %p196
      %p199 = scmp.ne.s32.totalorder %s182, %s198
      %p200 = scmp.eq.s32.totalorder %s22, 0
      %p201 = por %p199, %p200
      %p202 = scmp.le.s32.totalorder 1, %s16
      %p203 = scmp.lt.s32.totalorder %s16, 3
      %p204 = pnand %p202, %p203
      %p205 = pneg %p204
      // Predicated region
      $region9: #{tpu_custom_call.1} parent=5 // pred_check
        _
      $region10: #{tpu_custom_call.1} parent=5 // pred_check_branch
        %207 = sbr.rel (%p204) target = $region12
      $region11: #{tpu_custom_call.1} parent=5 // pred_region
        %s208 = ssub.s32 %s16, 1
        // Predicated region
        $region13: #{tpu_custom_call.1} parent=11 // pred_check
          %p209 = pneg %p63
        $region14: #{tpu_custom_call.1} parent=11 // pred_check_branch
          %211 = sbr.rel (%p209) target = $region16
        $region15: #{tpu_custom_call.1} parent=11 // pred_region
          _
        $region16: #{tpu_custom_call.1} parent=11 // pred_fallthru
          _
        // Predicated region
        $region17: #{tpu_custom_call.1} parent=11 // pred_check
          %p212 = pneg %p84
        $region18: #{tpu_custom_call.1} parent=11 // pred_check_branch
          %214 = sbr.rel (%p212) target = $region20
        $region19: #{tpu_custom_call.1} parent=11 // pred_region
          _
        $region20: #{tpu_custom_call.1} parent=11 // pred_fallthru
          _
        // Predicated region
        $region21: #{tpu_custom_call.1} parent=11 // pred_check
          %p215 = pneg %p105
        $region22: #{tpu_custom_call.1} parent=11 // pred_check_branch
          %217 = sbr.rel (%p215) target = $region24
        $region23: #{tpu_custom_call.1} parent=11 // pred_region
          _
        $region24: #{tpu_custom_call.1} parent=11 // pred_fallthru
          _
        // Predicated region
        $region25: #{tpu_custom_call.1} parent=11 // pred_check
          %p218 = pneg %p126
        $region26: #{tpu_custom_call.1} parent=11 // pred_check_branch
          %220 = sbr.rel (%p218) target = $region28
        $region27: #{tpu_custom_call.1} parent=11 // pred_region
          _
        $region28: #{tpu_custom_call.1} parent=11 // pred_fallthru
          _
        // Predicated region
        $region29: #{tpu_custom_call.1} parent=11 // pred_check
          %p221 = pneg %p147
        $region30: #{tpu_custom_call.1} parent=11 // pred_check_branch
          %223 = sbr.rel (%p221) target = $region32
        $region31: #{tpu_custom_call.1} parent=11 // pred_region
          _
        $region32: #{tpu_custom_call.1} parent=11 // pred_fallthru
          _
        // Predicated region
        $region33: #{tpu_custom_call.1} parent=11 // pred_check
          %p224 = pneg %p168
        $region34: #{tpu_custom_call.1} parent=11 // pred_check_branch
          %226 = sbr.rel (%p224) target = $region36
        $region35: #{tpu_custom_call.1} parent=11 // pred_region
          _
        $region36: #{tpu_custom_call.1} parent=11 // pred_fallthru
          _
      $region12: #{tpu_custom_call.1} parent=5 // pred_fallthru
        _
      %p227 = scmp.lt.s32.totalorder %s16, 2
      // Predicated region
      $region37: #{tpu_custom_call.1} parent=5 // pred_check
        %p228 = pneg %p227
      $region38: #{tpu_custom_call.1} parent=5 // pred_check_branch
        %230 = sbr.rel (%p228) target = $region40
      $region39: #{tpu_custom_call.1} parent=5 // pred_region
        // Predicated region
        $region41: #{tpu_custom_call.1} parent=39 // pred_check
          %p231 = pneg %p36
        $region42: #{tpu_custom_call.1} parent=39 // pred_check_branch
          %233 = sbr.rel (%p231) target = $region44
        $region43: #{tpu_custom_call.1} parent=39 // pred_region
          %p234 = scmp.lt.s32.totalorder %s16, 1
          %s235 = scalar_select %p234, %s16, 1
          %s236 = smul.addr %s235, 2
          %s237 = smul.addr %s236, 4
          %s238 = scalar_lea.vmem %s0, %s237
        $region44: #{tpu_custom_call.1} parent=39 // pred_fallthru
          _
      $region40: #{tpu_custom_call.1} parent=5 // pred_fallthru
        _
      %p239 = scmp.le.s32.totalorder 1, %s16
      %p240 = scmp.lt.s32.totalorder %s16, 3
      %p241 = pnand %p239, %p240
      %p242 = pneg %p241
      // Predicated region
      $region45: #{tpu_custom_call.1} parent=5 // pred_check
        _
      $region46: #{tpu_custom_call.1} parent=5 // pred_check_branch
        %244 = sbr.rel (%p241) target = $region48
      $region47: #{tpu_custom_call.1} parent=5 // pred_region
        %s245 = ssub.s32 %s16, 1
        %p246 = scmp.lt.s32.totalorder %s21, 1
        %s247 = scalar_select %p246, %s21, 1
        %s248 = smul.addr %s247, 2
        %s249 = smul.addr %s248, 4
        %s250 = scalar_lea.vmem %s0, %s249
        %p251 = pneg %p42
        %p252 = pneg %p39
        %p253 = pneg %p63
        %p254 = pneg %p60
        %p255 = pneg %p84
        %p256 = pneg %p81
        %p257 = pneg %p105
        %p258 = pneg %p102
        %p259 = pneg %p126
        %p260 = pneg %p123
        %p261 = pneg %p147
        %p262 = pneg %p144
        %p263 = pneg %p168
        %p264 = pneg %p165
        %p265 = pneg %p194
        %p266 = pneg %p191
        %s267 = sand.u32 %s181, 1
        %s268 = scalar_lea.sflag [#allocation3], %s267
        %s269 = sand.u32 %s181, 1
        %s270 = smul.addr %s269, 64
        %s271 = scalar_lea.vmem [#allocation2], %s270
        %p272 = scmp.lt.s32.totalorder %s21, 1
        %s273 = scalar_select %p272, %s21, 1
        %s274 = smul.addr %s273, 2
        %s275 = smul.addr %s274, 4
        %s276 = scalar_lea.vmem %s0, %s275
        %v277 = vld [vmem:[%s276] sm:$0xff]
        %v278 = vld [vmem:[%s1] sm:$0xff]
        %v279 = vld [vmem:[%s2] sm:$0xff]
        %281 = vset.pattern.permute.xlu0 0
        %282 = vperm.xlu0 %281, %v279
        %v283 = vpop.permute.xlu0 %282
        %v286 = vcombine.high %v277, %v277
        %vm287 = vcmask 31744
        %v289 = vsel %vm287, %v278, 0
        %vm291 = vcmask 1043456
        %v292 = vsel %vm291, %v277, 0
        %v294 = vsel %vm291, %v286, 0
        %296 = vmatprep.subr.mxu0 %v294
        %297 = vmatpush1.msra.mxu0 %v292
        %298 = vmatprep.subr.mxu0 0.0
        %299 = vmatpush1.msra.mxu0 0.0
        %300 = vmatprep.subr.mxu0 0.0
        %301 = vmatpush1.msra.mxu0 0.0
        %302 = vmatprep.subr.mxu0 0.0
        %303 = vmatpush1.msra.mxu0 0.0
        %304 = vmatprep.subr.mxu0 0.0
        %305 = vmatpush1.msra.mxu0 0.0
        %306 = vmatprep.subr.mxu0 0.0
        %307 = vmatpush1.msra.mxu0 0.0
        %308 = vmatprep.subr.mxu0 0.0
        %309 = vmatpush1.msra.mxu0 0.0
        %310 = vmatprep.subr.mxu0 0.0
        %311 = vmatpush1.msra.mxu0 0.0
        %312 = vmatprep.subr.mxu0 0.0
        %313 = vmatpush1.msra.mxu0 0.0
        %314 = vmatprep.subr.mxu0 0.0
        %315 = vmatpush1.msra.mxu0 0.0
        %316 = vmatprep.subr.mxu0 0.0
        %317 = vmatpush1.msra.mxu0 0.0
        %318 = vmatprep.subr.mxu0 0.0
        %319 = vmatpush1.msra.mxu0 0.0
        %320 = vmatprep.subr.mxu0 0.0
        %321 = vmatpush1.msra.mxu0 0.0
        %322 = vmatprep.subr.mxu0 0.0
        %323 = vmatpush1.msra.mxu0 0.0
        %324 = vmatprep.subr.mxu0 0.0
        %325 = vmatpush1.msra.mxu0 0.0
        %326 = vmatprep.subr.mxu0 0.0
        %327 = vmatpush1.msra.mxu0 0.0
        %328 = vmatprep.subr.mxu0 0.0
        %329 = vmatpush1.msra.mxu0 0.0
        %330 = vmatprep.subr.mxu0 0.0
        %331 = vmatpush1.msra.mxu0 0.0
        %332 = vmatprep.subr.mxu0 0.0
        %333 = vmatpush1.msra.mxu0 0.0
        %334 = vmatprep.subr.mxu0 0.0
        %335 = vmatpush1.msra.mxu0 0.0
        %336 = vmatprep.subr.mxu0 0.0
        %337 = vmatpush1.msra.mxu0 0.0
        %338 = vmatprep.subr.mxu0 0.0
        %339 = vmatpush1.msra.mxu0 0.0
        %340 = vmatprep.subr.mxu0 0.0
        %341 = vmatpush1.msra.mxu0 0.0
        %342 = vmatprep.subr.mxu0 0.0
        %343 = vmatpush1.msra.mxu0 0.0
        %344 = vmatprep.subr.mxu0 0.0
        %345 = vmatpush1.msra.mxu0 0.0
        %346 = vmatprep.subr.mxu0 0.0
        %347 = vmatpush1.msra.mxu0 0.0
        %348 = vmatprep.subr.mxu0 0.0
        %349 = vmatpush1.msra.mxu0 0.0
        %350 = vmatprep.subr.mxu0 0.0
        %351 = vmatpush1.msra.mxu0 0.0
        %352 = vmatprep.subr.mxu0 0.0
        %353 = vmatpush1.msra.mxu0 0.0
        %354 = vmatprep.subr.mxu0 0.0
        %355 = vmatpush1.msra.mxu0 0.0
        %356 = vmatprep.subr.mxu0 0.0
        %357 = vmatpush1.msra.mxu0 0.0
        %358 = vmatprep.subr.mxu0 0.0
        %359 = vmatpush1.msra.mxu0 0.0
        %360 = vmatprep.mubr.f32.mxu0 0.0
        %361 = vmatmul.mubr.f32.gmra.mrb[0].mxu0 %v289
        %v362 = vpop.f32.mrb[0].mxu0
        %v363 = vadd.f32 %v283, %v362
        %v364 = vpop.f32.mrb[0].mxu0
        %v365 = vadd.f32 %v283, %v364
        %366 = vdwg.mxu0
        %v367 = vmax.f32 %v363, 0.0
        %v368 = vmax.f32 %v365, 0.0
        %v369 = vld [vmem:[%s3] sm:$0xff]
        %v370 = vld [vmem:[%s4] sm:$0xff]
        %372 = vset.pattern.permute.xlu0 0
        %373 = vperm.xlu0 %372, %v370
        %v374 = vpop.permute.xlu0 %373
        %vm376 = vcmask 64512
        %v378 = vsel %vm376, %v369, 0
        %380 = vmatprep.subr.mxu0 %v368
        %381 = vmatpush1.msra.mxu0 %v367
        %382 = vmatprep.subr.mxu0 0.0
        %383 = vmatpush1.msra.mxu0 0.0
        %384 = vmatprep.subr.mxu0 0.0
        %385 = vmatpush1.msra.mxu0 0.0
        %386 = vmatprep.subr.mxu0 0.0
        %387 = vmatpush1.msra.mxu0 0.0
        %388 = vmatprep.subr.mxu0 0.0
        %389 = vmatpush1.msra.mxu0 0.0
        %390 = vmatprep.subr.mxu0 0.0
        %391 = vmatpush1.msra.mxu0 0.0
        %392 = vmatprep.subr.mxu0 0.0
        %393 = vmatpush1.msra.mxu0 0.0
        %394 = vmatprep.subr.mxu0 0.0
        %395 = vmatpush1.msra.mxu0 0.0
        %396 = vmatprep.subr.mxu0 0.0
        %397 = vmatpush1.msra.mxu0 0.0
        %398 = vmatprep.subr.mxu0 0.0
        %399 = vmatpush1.msra.mxu0 0.0
        %400 = vmatprep.subr.mxu0 0.0
        %401 = vmatpush1.msra.mxu0 0.0
        %402 = vmatprep.subr.mxu0 0.0
        %403 = vmatpush1.msra.mxu0 0.0
        %404 = vmatprep.subr.mxu0 0.0
        %405 = vmatpush1.msra.mxu0 0.0
        %406 = vmatprep.subr.mxu0 0.0
        %407 = vmatpush1.msra.mxu0 0.0
        %408 = vmatprep.subr.mxu0 0.0
        %409 = vmatpush1.msra.mxu0 0.0
        %410 = vmatprep.subr.mxu0 0.0
        %411 = vmatpush1.msra.mxu0 0.0
        %412 = vmatprep.subr.mxu0 0.0
        %413 = vmatpush1.msra.mxu0 0.0
        %414 = vmatprep.subr.mxu0 0.0
        %415 = vmatpush1.msra.mxu0 0.0
        %416 = vmatprep.subr.mxu0 0.0
        %417 = vmatpush1.msra.mxu0 0.0
        %418 = vmatprep.subr.mxu0 0.0
        %419 = vmatpush1.msra.mxu0 0.0
        %420 = vmatprep.subr.mxu0 0.0
        %421 = vmatpush1.msra.mxu0 0.0
        %422 = vmatprep.subr.mxu0 0.0
        %423 = vmatpush1.msra.mxu0 0.0
        %424 = vmatprep.subr.mxu0 0.0
        %425 = vmatpush1.msra.mxu0 0.0
        %426 = vmatprep.subr.mxu0 0.0
        %427 = vmatpush1.msra.mxu0 0.0
        %428 = vmatprep.subr.mxu0 0.0
        %429 = vmatpush1.msra.mxu0 0.0
        %430 = vmatprep.subr.mxu0 0.0
        %431 = vmatpush1.msra.mxu0 0.0
        %432 = vmatprep.subr.mxu0 0.0
        %433 = vmatpush1.msra.mxu0 0.0
        %434 = vmatprep.subr.mxu0 0.0
        %435 = vmatpush1.msra.mxu0 0.0
        %436 = vmatprep.subr.mxu0 0.0
        %437 = vmatpush1.msra.mxu0 0.0
        %438 = vmatprep.subr.mxu0 0.0
        %439 = vmatpush1.msra.mxu0 0.0
        %440 = vmatprep.subr.mxu0 0.0
        %441 = vmatpush1.msra.mxu0 0.0
        %442 = vmatprep.subr.mxu0 0.0
        %443 = vmatpush1.msra.mxu0 0.0
        %444 = vmatprep.mubr.f32.mxu0 0.0
        %445 = vmatmul.mubr.f32.gmra.mrb[0].mxu0 %v378
        %v446 = vpop.f32.mrb[0].mxu0
        %v447 = vadd.f32 %v374, %v446
        %v448 = vpop.f32.mrb[0].mxu0
        %v449 = vadd.f32 %v374, %v448
        %450 = vdwg.mxu0
        %v451 = vlaneseq
        %v452 = vand.u32 %v451, 127
        %v453 = vadd.s32 %v452, 128
        %v454 = vand.u32 %v452, 15
        %v455 = vand.u32 %v453, 15
        %456 = vrot.lane.b32.xlu0 %v447, 17
        %v457 = vpop.permute.xlu0 %456
        %458 = vrot.lane.b32.xlu0 %v449, 17
        %v459 = vpop.permute.xlu0 %458
        %vm460 = vcmp.lt.s32.totalorder %v452, 17
        %v461 = vsel %vm460, %v457, %v459
        %v462 = vsel %vm460, %v459, %v457
        %vm463 = vcmp.ge.s32.totalorder %v454, 1
        %vm464 = vcmp.ge.s32.totalorder %v455, 1
        %vm465 = vcmp.ge.s32.totalorder %v452, 16
        %vm466 = vcmp.ge.s32.totalorder %v453, 16
        %vm467 = vmand %vm463, %vm465
        %vm468 = vmand %vm464, %vm466
        %v469 = vsel %vm467, %v462, 0.0
        %v470 = vsel %vm468, %v461, 0.0
        %471 = vrot.lane.b32.xlu0 %v447, 16
        %v472 = vpop.permute.xlu0 %471
        %473 = vrot.lane.b32.xlu0 %v449, 16
        %v474 = vpop.permute.xlu0 %473
        %vm475 = vcmp.lt.s32.totalorder %v452, 16
        %v476 = vsel %vm475, %v472, %v474
        %v477 = vsel %vm475, %v474, %v472
        %v478 = vsel %vm465, %v477, 0.0
        %v479 = vsel %vm466, %v476, 0.0
        %480 = vrot.lane.b32.xlu0 %v447, 15
        %v481 = vpop.permute.xlu0 %480
        %482 = vrot.lane.b32.xlu0 %v449, 15
        %v483 = vpop.permute.xlu0 %482
        %vm484 = vcmp.lt.s32.totalorder %v452, 15
        %v485 = vsel %vm484, %v481, %v483
        %v486 = vsel %vm484, %v483, %v481
        %vm487 = vcmp.lt.s32.totalorder %v454, 15
        %vm488 = vcmp.lt.s32.totalorder %v455, 15
        %vm489 = vmand %vm487, %vm465
        %vm490 = vmand %vm488, %vm466
        %v491 = vsel %vm489, %v486, 0.0
        %v492 = vsel %vm490, %v485, 0.0
        %493 = vrot.lane.b32.xlu0 %v447, 1
        %v494 = vpop.permute.xlu0 %493
        %495 = vrot.lane.b32.xlu0 %v449, 1
        %v496 = vpop.permute.xlu0 %495
        %vm497 = vcmp.lt.s32.totalorder %v452, 1
        %v498 = vsel %vm497, %v494, %v496
        %v499 = vsel %vm497, %v496, %v494
        %v500 = vsel %vm463, %v499, 0.0
        %v501 = vsel %vm464, %v498, 0.0
        %502 = vrot.lane.b32.xlu0 %v447, 127
        %v503 = vpop.permute.xlu0 %502
        %504 = vrot.lane.b32.xlu0 %v449, 127
        %v505 = vpop.permute.xlu0 %504
        %vm506 = vcmp.lt.s32.totalorder %v452, 127
        %v507 = vsel %vm506, %v503, %v505
        %v508 = vsel %vm506, %v505, %v503
        %v509 = vsel %vm487, %v507, 0.0
        %v510 = vsel %vm488, %v508, 0.0
        %511 = vrot.lane.b32.xlu0 %v447, 113
        %v512 = vpop.permute.xlu0 %511
        %513 = vrot.lane.b32.xlu0 %v449, 113
        %v514 = vpop.permute.xlu0 %513
        %vm515 = vcmp.lt.s32.totalorder %v452, 113
        %v516 = vsel %vm515, %v512, %v514
        %v517 = vsel %vm515, %v514, %v512
        %vm518 = vcmp.lt.s32.totalorder %v452, 240
        %vm519 = vcmp.lt.s32.totalorder %v453, 240
        %vm520 = vmand %vm463, %vm518
        %vm521 = vmand %vm464, %vm519
        %v522 = vsel %vm520, %v516, 0.0
        %v523 = vsel %vm521, %v517, 0.0
        %524 = vrot.lane.b32.xlu0 %v447, 112
        %v525 = vpop.permute.xlu0 %524
        %526 = vrot.lane.b32.xlu0 %v449, 112
        %v527 = vpop.permute.xlu0 %526
        %vm528 = vcmp.lt.s32.totalorder %v452, 112
        %v529 = vsel %vm528, %v525, %v527
        %v530 = vsel %vm528, %v527, %v525
        %v531 = vsel %vm518, %v529, 0.0
        %v532 = vsel %vm519, %v530, 0.0
        %533 = vrot.lane.b32.xlu0 %v447, 111
        %v534 = vpop.permute.xlu0 %533
        %535 = vrot.lane.b32.xlu0 %v449, 111
        %v536 = vpop.permute.xlu0 %535
        %vm537 = vcmp.lt.s32.totalorder %v452, 111
        %v538 = vsel %vm537, %v534, %v536
        %v539 = vsel %vm537, %v536, %v534
        %vm540 = vmand %vm487, %vm518
        %vm541 = vmand %vm488, %vm519
        %v542 = vsel %vm540, %v538, 0.0
        %v543 = vsel %vm541, %v539, 0.0
        %v544 = vld [vmem:[%s5] sm:$0xff]
        %v545 = vld [vmem:[%s5 + $0x8] sm:$0xff]
        %v546 = vld [vmem:[%s5 + $0x10] sm:$0xff]
        %v547 = vld [vmem:[%s5 + $0x18] sm:$0xff]
        %v548 = vld [vmem:[%s6] sm:$0xff]
        %v549 = vld [vmem:[%s6 + $0x8] sm:$0xff]
        %v550 = vld [vmem:[%s6 + $0x10] sm:$0xff]
        %v551 = vld [vmem:[%s6 + $0x18] sm:$0xff]
        %553 = vset.pattern.permute.xlu0 0
        %554 = vperm.xlu0 %553, %v548
        %v555 = vpop.permute.xlu0 %554
        %558 = vset.pattern.permute.xlu0 0
        %559 = vperm.xlu0 %558, %v549
        %v560 = vpop.permute.xlu0 %559
        %563 = vset.pattern.permute.xlu0 0
        %564 = vperm.xlu0 %563, %v550
        %v565 = vpop.permute.xlu0 %564
        %568 = vset.pattern.permute.xlu0 0
        %569 = vperm.xlu0 %568, %v551
        %v570 = vpop.permute.xlu0 %569
        %vm572 = vcmask 588800
        %v574 = vsel %vm572, %v544, 0
        %v577 = vsel %vm572, %v545, 0
        %v580 = vsel %vm572, %v546, 0
        %v583 = vsel %vm572, %v547, 0
        %585 = vmatprep.subr.mxu0 %v470
        %586 = vmatpush1.msra.mxu0 %v469
        %587 = vmatprep.subr.mxu0 %v479
        %588 = vmatpush1.msra.mxu0 %v478
        %589 = vmatprep.subr.mxu0 %v492
        %590 = vmatpush1.msra.mxu0 %v491
        %591 = vmatprep.subr.mxu0 %v501
        %592 = vmatpush1.msra.mxu0 %v500
        %593 = vmatprep.subr.mxu0 %v449
        %594 = vmatpush1.msra.mxu0 %v447
        %595 = vmatprep.subr.mxu0 %v510
        %596 = vmatpush1.msra.mxu0 %v509
        %597 = vmatprep.subr.mxu0 %v523
        %598 = vmatpush1.msra.mxu0 %v522
        %599 = vmatprep.subr.mxu0 %v532
        %600 = vmatpush1.msra.mxu0 %v531
        %601 = vmatprep.subr.mxu0 %v543
        %602 = vmatpush1.msra.mxu0 %v542
        %603 = vmatprep.subr.mxu0 0.0
        %604 = vmatpush1.msra.mxu0 0.0
        %605 = vmatprep.subr.mxu0 0.0
        %606 = vmatpush1.msra.mxu0 0.0
        %607 = vmatprep.subr.mxu0 0.0
        %608 = vmatpush1.msra.mxu0 0.0
        %609 = vmatprep.subr.mxu0 0.0
        %610 = vmatpush1.msra.mxu0 0.0
        %611 = vmatprep.subr.mxu0 0.0
        %612 = vmatpush1.msra.mxu0 0.0
        %613 = vmatprep.subr.mxu0 0.0
        %614 = vmatpush1.msra.mxu0 0.0
        %615 = vmatprep.subr.mxu0 0.0
        %616 = vmatpush1.msra.mxu0 0.0
        %617 = vmatprep.subr.mxu0 0.0
        %618 = vmatpush1.msra.mxu0 0.0
        %619 = vmatprep.subr.mxu0 0.0
        %620 = vmatpush1.msra.mxu0 0.0
        %621 = vmatprep.subr.mxu0 0.0
        %622 = vmatpush1.msra.mxu0 0.0
        %623 = vmatprep.subr.mxu0 0.0
        %624 = vmatpush1.msra.mxu0 0.0
        %625 = vmatprep.subr.mxu0 0.0
        %626 = vmatpush1.msra.mxu0 0.0
        %627 = vmatprep.subr.mxu0 0.0
        %628 = vmatpush1.msra.mxu0 0.0
        %629 = vmatprep.subr.mxu0 0.0
        %630 = vmatpush1.msra.mxu0 0.0
        %631 = vmatprep.subr.mxu0 0.0
        %632 = vmatpush1.msra.mxu0 0.0
        %633 = vmatprep.subr.mxu0 0.0
        %634 = vmatpush1.msra.mxu0 0.0
        %635 = vmatprep.subr.mxu0 0.0
        %636 = vmatpush1.msra.mxu0 0.0
        %637 = vmatprep.subr.mxu0 0.0
        %638 = vmatpush1.msra.mxu0 0.0
        %639 = vmatprep.subr.mxu0 0.0
        %640 = vmatpush1.msra.mxu0 0.0
        %641 = vmatprep.subr.mxu0 0.0
        %642 = vmatpush1.msra.mxu0 0.0
        %643 = vmatprep.subr.mxu0 0.0
        %644 = vmatpush1.msra.mxu0 0.0
        %645 = vmatprep.subr.mxu0 0.0
        %646 = vmatpush1.msra.mxu0 0.0
        %647 = vmatprep.subr.mxu0 0.0
        %648 = vmatpush1.msra.mxu0 0.0
        %649 = vmatprep.mubr.f32.mxu0 0.0
        %650 = vmatmul.mubr.f32.gmra.mrb[0].mxu0 %v574
        %v651 = vpop.f32.mrb[0].mxu0
        %v652 = vadd.f32 %v555, %v651
        %v653 = vpop.f32.mrb[0].mxu0
        %v654 = vadd.f32 %v555, %v653
        %655 = vmatprep.mubr.f32.mxu0 0.0
        %656 = vmatmul.mubr.f32.gmra.mrb[0].mxu0 %v577
        %v657 = vpop.f32.mrb[0].mxu0
        %v658 = vadd.f32 %v560, %v657
        %v659 = vpop.f32.mrb[0].mxu0
        %v660 = vadd.f32 %v560, %v659
        %661 = vmatprep.mubr.f32.mxu0 0.0
        %662 = vmatmul.mubr.f32.gmra.mrb[0].mxu0 %v580
        %v663 = vpop.f32.mrb[0].mxu0
        %v664 = vadd.f32 %v565, %v663
        %v665 = vpop.f32.mrb[0].mxu0
        %v666 = vadd.f32 %v565, %v665
        %667 = vmatprep.mubr.f32.mxu0 0.0
        %668 = vmatmul.mubr.f32.gmra.mrb[0].mxu0 %v583
        %v669 = vpop.f32.mrb[0].mxu0
        %v670 = vadd.f32 %v570, %v669
        %v671 = vpop.f32.mrb[0].mxu0
        %v672 = vadd.f32 %v570, %v671
        %673 = vdwg.mxu0
        %v674 = vmax.f32 %v652, 0.0
        %v675 = vmax.f32 %v654, 0.0
        %v676 = vmax.f32 %v658, 0.0
        %v677 = vmax.f32 %v660, 0.0
        %v678 = vmax.f32 %v664, 0.0
        %v679 = vmax.f32 %v666, 0.0
        %v680 = vmax.f32 %v670, 0.0
        %v681 = vmax.f32 %v672, 0.0
        %682 = vst [vmem:[%s271] sm:$0xff] %v674
        %683 = vst [vmem:[%s271 + $0x8] sm:$0xff] %v675
        %684 = vst [vmem:[%s271 + $0x10] sm:$0xff] %v676
        %685 = vst [vmem:[%s271 + $0x18] sm:$0xff] %v677
        %686 = vst [vmem:[%s271 + $0x20] sm:$0xff] %v678
        %687 = vst [vmem:[%s271 + $0x28] sm:$0xff] %v679
        %688 = vst [vmem:[%s271 + $0x30] sm:$0xff] %v680
        %689 = vst [vmem:[%s271 + $0x38] sm:$0xff] %v681
        %s690 = sand.u32 %s181, 1
        %s691 = scalar_lea.sflag [#allocation3], %s690
        %s692 = sand.u32 %s181, 1
        %s693 = smul.addr %s692, 64
        %s694 = scalar_lea.vmem [#allocation2], %s693
        // Predicated region
        $region49: #{tpu_custom_call.1} parent=47 // pred_check
          %p695 = pneg %p191
        $region50: #{tpu_custom_call.1} parent=47 // pred_check_branch
          %697 = sbr.rel (%p695) target = $region52
        $region51: #{tpu_custom_call.1} parent=47 // pred_region
          %s699 = ssub.s32 1024, 1024
          %700 = vsyncadd %s691, %s699
          %s701 = smul.addr %s21, 8
          %s702 = smul.addr %s701, 128
          %s703 = scalar_lea.hbm %s7, %s702
          %s704 = sshll.u32 %s694, 4
          %s705 = int_to_ptr.vmem [resolvable:$true] %s704
          %710 = dma.vmem_to_hbm [thread:$0]  %s705, 1024, %s703, %s691, 256, 256, 16
        $region52: #{tpu_custom_call.1} parent=47 // pred_fallthru
          _
      $region48: #{tpu_custom_call.1} parent=5 // pred_fallthru
        _
      %p711 = scmp.le.s32.totalorder 2, %s16
      // Predicated region
      $region53: #{tpu_custom_call.1} parent=5 // pred_check
        %p712 = pneg %p711
      $region54: #{tpu_custom_call.1} parent=5 // pred_check_branch
        %714 = sbr.rel (%p712) target = $region56
      $region55: #{tpu_custom_call.1} parent=5 // pred_region
        %s715 = ssub.s32 %s16, 2
        // Predicated region
        $region57: #{tpu_custom_call.1} parent=55 // pred_check
          %p716 = pneg %p197
        $region58: #{tpu_custom_call.1} parent=55 // pred_check_branch
          %718 = sbr.rel (%p716) target = $region60
        $region59: #{tpu_custom_call.1} parent=55 // pred_region
          %s719 = sand.u32 %s182, 1
          %s720 = scalar_lea.sflag [#allocation3], %s719
          %s721 = sand.u32 %s182, 1
          %s722 = smul.addr %s721, 64
          %s723 = scalar_lea.vmem [#allocation2], %s722
          %724 = dma.done %s720, 1024
        $region60: #{tpu_custom_call.1} parent=55 // pred_fallthru
          _
      $region56: #{tpu_custom_call.1} parent=5 // pred_fallthru
        _
    $region6: #{tpu_custom_call.1} parent=1 // loop_footer
      %s20 = sadd.s32 1, %s16
    $region7: #{tpu_custom_call.1} parent=1 // loop_footer_branch
      %15 = sbr.rel target = $region3
    $region8: #{tpu_custom_call.1} parent=1 // loop_exit
      _
    %725 = vsyncpa [#allocation3], 1
    %s726 = scalar_lea.sflag [#allocation3], 1
    %727 = vsyncpa %s726, 1

</llo_original>
